<compile_context>
chip_gen: v5e
topology: v5e:2x2
jax: 0.10.0
libtpu: 0.0.40
codegen_flags: <defaults>
</compile_context>

<pallas_src>
import functools

import jax
import jax.numpy as jnp
from jax.experimental import pallas as pl
from jax.experimental.pallas import tpu as pltpu


# ----------------------------------------------------------------------------
# helpers
# ----------------------------------------------------------------------------
def _round_up(x, m):
    return ((x + m - 1) // m) * m


def _cdiv(a, b):
    return (a + b - 1) // b


def _vmem_capacity_bytes():
    """Physical VMEM bytes; device-kind aware fallback."""
    try:
        cap = int(getattr(pltpu.get_tpu_info(), "vmem_capacity_bytes"))
        if cap > 0:
            return cap
    except Exception:
        pass
    try:
        kind = jax.devices()[0].device_kind.lower()
    except Exception:
        kind = ""
    if "v7" in kind:
        return 64 * 1024 * 1024          # 64 MiB / TensorCore on v7x
    return 128 * 1024 * 1024             # 128 MiB on v5e / v6e


def _bytes_per_elem(in_dtype, out_dtype):
    """Live VMEM bytes per block element: double-buffered in + out + ~2 f32 temps."""
    return (2 * jnp.dtype(in_dtype).itemsize
            + 2 * jnp.dtype(out_dtype).itemsize
            + 2 * 4)


def _choose_feature_tile(f, rows, bpe, budget, *, max_tf=8192, min_split_lane=256):
    """Lane-dense feature tile: multiple of 128, fits budget, keeps >=2 blocks
    on the (parallel) feature axis when the axis is wide enough."""
    f_lane = _round_up(f, 128)
    tf_cap = max(128, (budget // max(bpe * max(rows, 1), 1)) // 128 * 128)
    tf = max(128, min(f_lane, tf_cap, max_tf))
    half = _round_up(_cdiv(f_lane, 2), 128)
    if half >= min_split_lane:           # each block still wide -> split for megacore
        tf = min(tf, half)
    return tf


# ----------------------------------------------------------------------------
# kernels
# ----------------------------------------------------------------------------
def _bn1d_single_pass_kernel(x_ref, w_ref, b_ref, o_ref, *, eps, n_points):
    """Full N rows of a TF-wide feature slab resident in VMEM."""
    xf = x_ref[...].astype(jnp.float32)                         # (N, TF)
    inv_n = jnp.float32(1.0 / n_points)
    mean = jnp.sum(xf, axis=0, keepdims=True) * inv_n           # (1, TF)
    mean_sq = jnp.sum(xf * xf, axis=0, keepdims=True) * inv_n   # (1, TF)
    var = jnp.maximum(mean_sq - mean * mean, 0.0)               # clamp cancellation
    inv_std = jax.lax.rsqrt(var + jnp.float32(eps))             # EUP, no divide
    scale = inv_std * w_ref[...].astype(jnp.float32)
    shift = b_ref[...].astype(jnp.float32) - mean * scale
    o_ref[...] = (xf * scale + shift).astype(o_ref.dtype)


def _bn1d_stats_kernel(x_ref, w_ref, b_ref, scale_ref, shift_ref,
                       sum_ref, sq_ref, *, eps, n_points, n_rows, tn):
    """Pass 1 of the two-pass fallback: accumulate sublane partial sums over
    N tiles (pure VPU adds), emit folded (scale, shift) at the last step."""
    i = pl.program_id(1)  # N (reduction) axis, last in grid

    @pl.when(i == 0)
    def _init():
        sum_ref[...] = jnp.zeros_like(sum_ref)
        sq_ref[...] = jnp.zeros_like(sq_ref)

    xf = x_ref[...].astype(jnp.float32)                         # (TN, TF)
    if n_rows % tn != 0:
        # Ragged last tile: rows beyond n_rows hold stale VMEM -> mask them.
        row = i * tn + jax.lax.broadcasted_iota(jnp.int32, xf.shape, 0)
        xf = jnp.where(row < n_rows, xf, 0.0)

    # (TN, TF) -> (TN/8, 8, TF): sum over leading axis is whole-vreg VPU adds.
    xr = xf.reshape(tn // 8, 8, xf.shape[-1])
    sum_ref[...] += jnp.sum(xr, axis=0)
    sq_ref[...] += jnp.sum(xr * xr, axis=0)

    @pl.when(i == pl.num_programs(1) - 1)
    def _finalize():
        inv_n = jnp.float32(1.0 / n_points)
        s = jnp.sum(sum_ref[...], axis=0, keepdims=True)        # one XLU collapse
        sq = jnp.sum(sq_ref[...], axis=0, keepdims=True)
        mean = s * inv_n
        var = jnp.maximum(sq * inv_n - mean * mean, 0.0)
        inv_std = jax.lax.rsqrt(var + jnp.float32(eps))
        scale = inv_std * w_ref[...].astype(jnp.float32)
        scale_ref[...] = scale
        shift_ref[...] = b_ref[...].astype(jnp.float32) - mean * scale


def _bn1d_apply_kernel(x_ref, scale_ref, shift_ref, o_ref):
    """Pass 2 of the two-pass fallback: streaming folded affine."""
    xf = x_ref[...].astype(jnp.float32)
    o_ref[...] = (xf * scale_ref[...] + shift_ref[...]).astype(o_ref.dtype)


# ----------------------------------------------------------------------------
# wrapper
# ----------------------------------------------------------------------------
def distributed_bn1d(x, weight, bias, eps=1e-5, *,
                     vmem_budget_bytes=None, force_two_pass=False):
    """Forward pass of DistributedBN1D (single-worker distributed semantics)."""
    assert x.ndim == 2, "distributedBN1D must have a 2D input"
    n, f = x.shape
    assert weight.shape == (f,) and bias.shape == (f,)

    capacity = _vmem_capacity_bytes()
    budget = int(vmem_budget_bytes) if vmem_budget_bytes else capacity // 2
    # Scoped-VMEM limit handed to Mosaic: above small defaults, below physical.
    vmem_limit = int(min(max(32 * 1024 * 1024, budget + 8 * 1024 * 1024),
                         capacity - 8 * 1024 * 1024))
    vmem_limit = max(vmem_limit, 16 * 1024 * 1024)

    bpe = _bytes_per_elem(x.dtype, x.dtype)
    w2 = weight.reshape(1, f)
    b2 = bias.reshape(1, f)

    # Single-pass iff the narrowest (n, 128) f column slab fits the budget.
    single_pass = (not force_two_pass) and (bpe * n * 128 <= budget)

    if single_pass:
        tf = _choose_feature_tile(f, n, bpe, budget)
        kernel = functools.partial(_bn1d_single_pass_kernel,
                                   eps=float(eps), n_points=n)
        return pl.pallas_call(
            kernel,
            out_shape=jax.ShapeDtypeStruct((n, f), x.dtype),
            grid=(pl.cdiv(f, tf),),
            in_specs=[
                pl.BlockSpec((n, tf), lambda j: (0, j)),
                pl.BlockSpec((1, tf), lambda j: (0, j)),
                pl.BlockSpec((1, tf), lambda j: (0, j)),
            ],
            out_specs=pl.BlockSpec((n, tf), lambda j: (0, j)),
            compiler_params=pltpu.CompilerParams(
                dimension_semantics=("parallel",),
                vmem_limit_bytes=vmem_limit),
        )(x, w2, b2)

    # ---- two-pass fallback: N too large to hold a full column slab in VMEM ----
    f_lane = _round_up(f, 128)
    tf = min(f_lane, 1024)
    half = _round_up(_cdiv(f_lane, 2), 128)
    if half >= 256:                       # keep >=2 feature blocks when wide
        tf = min(tf, half)
    tn = (budget // max(bpe * tf, 1)) // 8 * 8
    tn = max(8, min(tn, _round_up(n, 8), 2048))

    # Pass 1: per-feature stats -> folded (scale, shift). Reduction axis last.
    scale, shift = pl.pallas_call(
        functools.partial(_bn1d_stats_kernel, eps=float(eps),
                          n_points=n, n_rows=n, tn=tn),
        out_shape=(jax.ShapeDtypeStruct((1, f), jnp.float32),
                   jax.ShapeDtypeStruct((1, f), jnp.float32)),
        grid=(pl.cdiv(f, tf), pl.cdiv(n, tn)),
        in_specs=[
            pl.BlockSpec((tn, tf), lambda j, i: (i, j)),
            pl.BlockSpec((1, tf), lambda j, i: (0, j)),
            pl.BlockSpec((1, tf), lambda j, i: (0, j)),
        ],
        out_specs=(pl.BlockSpec((1, tf), lambda j, i: (0, j)),
                   pl.BlockSpec((1, tf), lambda j, i: (0, j))),
        scratch_shapes=[pltpu.VMEM((8, tf), jnp.float32),
                        pltpu.VMEM((8, tf), jnp.float32)],
        compiler_params=pltpu.CompilerParams(
            dimension_semantics=("parallel", "arbitrary"),
            vmem_limit_bytes=vmem_limit),
    )(x, w2, b2)

    # Pass 2: streaming folded affine, both axes parallel.
    return pl.pallas_call(
        _bn1d_apply_kernel,
        out_shape=jax.ShapeDtypeStruct((n, f), x.dtype),
        grid=(pl.cdiv(n, tn), pl.cdiv(f, tf)),
        in_specs=[
            pl.BlockSpec((tn, tf), lambda i, j: (i, j)),
            pl.BlockSpec((1, tf), lambda i, j: (0, j)),
            pl.BlockSpec((1, tf), lambda i, j: (0, j)),
        ],
        out_specs=pl.BlockSpec((tn, tf), lambda i, j: (i, j)),
        compiler_params=pltpu.CompilerParams(
            dimension_semantics=("parallel", "parallel"),
            vmem_limit_bytes=vmem_limit),
    )(x, scale, shift)


# ----------------------------------------------------------------------------
# reference + test
# ----------------------------------------------------------------------------
def _reference(x, w, b, eps):
    mean = jnp.mean(x, axis=0, keepdims=True)
    var = jnp.mean(x * x, axis=0, keepdims=True) - mean * mean
    std = jnp.sqrt(var + eps)
    return (x - mean) / std * w[None, :] + b[None, :]


if __name__ == "__main__":
    key = jax.random.PRNGKey(0)

    # --- test 1: single-pass path (small 2D input: batch=8, n_feats=32) ---
    N, F = 8, 32
    k1, k2, k3, k4, k5, k6 = jax.random.split(key, 6)
    x = jax.random.normal(k1, (N, F), dtype=jnp.float32)
    weight = 1.0 + 0.1 * jax.random.normal(k2, (F,), dtype=jnp.float32)
    bias = 0.1 * jax.random.normal(k3, (F,), dtype=jnp.float32)

    out = distributed_bn1d(x, weight, bias, eps=1e-5)
    out = jax.block_until_ready(out)
    ref = _reference(x, weight, bias, 1e-5)
    assert out.shape == (N, F)
    assert jnp.allclose(out, ref, atol=1e-4, rtol=1e-4), "single-pass mismatch"

    # --- test 2: two-pass fallback path (non-aligned N & F, forced) ---
    N2, F2 = 24, 160
    x2 = jax.random.normal(k4, (N2, F2), dtype=jnp.float32)
    w2 = 1.0 + 0.1 * jax.random.normal(k5, (F2,), dtype=jnp.float32)
    b2 = 0.1 * jax.random.normal(k6, (F2,), dtype=jnp.float32)

    out2 = distributed_bn1d(x2, w2, b2, eps=1e-5, force_two_pass=True)
    out2 = jax.block_until_ready(out2)
    ref2 = _reference(x2, w2, b2, 1e-5)
    assert out2.shape == (N2, F2)
    assert jnp.allclose(out2, ref2, atol=1e-4, rtol=1e-4), "two-pass mismatch"

    print("KERNEL_OK")
</pallas_src>

<mosaic_0001>
module attributes {stable_mosaic.version = 11 : i64} {
  func.func @_bn1d_single_pass_kernel(%arg0: i32, %arg1: memref<8x128xf32, #tpu.memory_space<vmem>>, %arg2: memref<1x128xf32, #tpu.memory_space<vmem>>, %arg3: memref<1x128xf32, #tpu.memory_space<vmem>>, %arg4: memref<8x128xf32, #tpu.memory_space<vmem>>) attributes {dimension_semantics = [#tpu.dimension_semantics<parallel>], iteration_bounds = array<i64: 1>, scalar_prefetch = 0 : i64, scratch_operands = 0 : i64, tpu.core_type = #tpu.core_type<tc>, window_params = [{transform_indices = @transform_0, window_bounds = array<i64: 8, 128>}, {transform_indices = @transform_1, window_bounds = array<i64: 1, 128>}, {transform_indices = @transform_2, window_bounds = array<i64: 1, 128>}, {transform_indices = @transform_3, window_bounds = array<i64: 8, 128>}]} {
    %c0 = arith.constant 0 : index
    %c0_0 = arith.constant 0 : index
    %0 = vector.load %arg1[%c0, %c0_0] : memref<8x128xf32, #tpu.memory_space<vmem>>, vector<8x128xf32>
    %cst = arith.constant dense<0.000000e+00> : vector<128xf32>
    %1 = vector.multi_reduction <add>, %0, %cst [0] : vector<8x128xf32> to vector<128xf32>
    %2 = vector.shape_cast %1 : vector<128xf32> to vector<1x128xf32>
    %cst_1 = arith.constant 1.250000e-01 : f32
    %3 = vector.broadcast %cst_1 : f32 to vector<1x128xf32>
    %4 = arith.mulf %2, %3 : vector<1x128xf32>
    %5 = arith.mulf %0, %0 : vector<8x128xf32>
    %cst_2 = arith.constant dense<0.000000e+00> : vector<128xf32>
    %6 = vector.multi_reduction <add>, %5, %cst_2 [0] : vector<8x128xf32> to vector<128xf32>
    %7 = vector.shape_cast %6 : vector<128xf32> to vector<1x128xf32>
    %cst_3 = arith.constant 1.250000e-01 : f32
    %8 = vector.broadcast %cst_3 : f32 to vector<1x128xf32>
    %9 = arith.mulf %7, %8 : vector<1x128xf32>
    %10 = arith.mulf %4, %4 : vector<1x128xf32>
    %11 = arith.subf %9, %10 : vector<1x128xf32>
    %cst_4 = arith.constant 0.000000e+00 : f32
    %12 = vector.broadcast %cst_4 : f32 to vector<1x128xf32>
    %13 = arith.maximumf %11, %12 : vector<1x128xf32>
    %cst_5 = arith.constant 9.99999974E-6 : f32
    %14 = vector.broadcast %cst_5 : f32 to vector<1x128xf32>
    %15 = arith.addf %13, %14 : vector<1x128xf32>
    %16 = math.rsqrt %15 : vector<1x128xf32>
    %c0_6 = arith.constant 0 : index
    %c0_7 = arith.constant 0 : index
    %17 = vector.load %arg2[%c0_6, %c0_7] : memref<1x128xf32, #tpu.memory_space<vmem>>, vector<1x128xf32>
    %18 = arith.mulf %16, %17 : vector<1x128xf32>
    %c0_8 = arith.constant 0 : index
    %c0_9 = arith.constant 0 : index
    %19 = vector.load %arg3[%c0_8, %c0_9] : memref<1x128xf32, #tpu.memory_space<vmem>>, vector<1x128xf32>
    %20 = arith.mulf %4, %18 : vector<1x128xf32>
    %21 = arith.subf %19, %20 : vector<1x128xf32>
    %22 = vector.broadcast %18 : vector<1x128xf32> to vector<8x128xf32>
    %23 = arith.mulf %0, %22 : vector<8x128xf32>
    %24 = vector.broadcast %21 : vector<1x128xf32> to vector<8x128xf32>
    %25 = arith.addf %23, %24 : vector<8x128xf32>
    %c0_10 = arith.constant 0 : index
    %c0_11 = arith.constant 0 : index
    %26 = vector.load %arg4[%c0_10, %c0_11] : memref<8x128xf32, #tpu.memory_space<vmem>>, vector<8x128xf32>
    tpu.vector_store %arg4[%c0_10, %c0_11], %25 {strides = array<i32>} : memref<8x128xf32, #tpu.memory_space<vmem>>, vector<8x128xf32>,
    return
  }
  func.func @transform_0(%arg0: i32) -> (i32, i32) {
    %c0_i32 = arith.constant 0 : i32
    %c0_i32_0 = arith.constant 0 : i32
    return %c0_i32, %arg0 : i32, i32
  }
  func.func @transform_1(%arg0: i32) -> (i32, i32) {
    %c0_i32 = arith.constant 0 : i32
    %c0_i32_0 = arith.constant 0 : i32
    return %c0_i32, %arg0 : i32, i32
  }
  func.func @transform_2(%arg0: i32) -> (i32, i32) {
    %c0_i32 = arith.constant 0 : i32
    %c0_i32_0 = arith.constant 0 : i32
    return %c0_i32, %arg0 : i32, i32
  }
  func.func @transform_3(%arg0: i32) -> (i32, i32) {
    %c0_i32 = arith.constant 0 : i32
    %c0_i32_0 = arith.constant 0 : i32
    return %c0_i32, %arg0 : i32, i32
  }
}

</mosaic_0001>

<llo_original>
// kernel: tpu_custom_call.1
$region0: #{tpu_custom_call.1}
  #allocation0 [shape = 'u32[]', space=smem, size = 0x4, offset = 0x4, fixed_abs, tag = 'smem constant byte address 0x4 - core index']
  #allocation1 [shape = 'u32[72,128]{1,0:T(1,128)}', space=vmem, size = 0x9000, scoped, tag = 'internal scratch']
  %s0 = inlined_call_operand.hbm [shape: f32[8,32], index: 0, kind: input, shape index: {}]
  %s1 = inlined_call_operand.hbm [shape: f32[1,32], index: 1, kind: input, shape index: {}]
  %s2 = inlined_call_operand.vmem [shape: f32[1,32], index: 2, kind: input, shape index: {}]
  %s3 = inlined_call_operand.hbm [shape: f32[8,32], index: 3, kind: output, shape index: {}]
  %s4 = sld [smem:[#allocation0]]
  $region30: #{tpu_custom_call.1} parent=0
    _
  %s6 = ssub.s32 1, %s4
  %s7 = scalar_select 0, %s6, %s4
  $region1: #{tpu_custom_call.1} parent=0
    #allocation2 [shape = 'u8[4096]{0}', space=vmem, size = 0x1000, scoped, tag = 'input window, operand 0, single buffered']
    #allocation3 [shape = 's32[1]{0}', space=sflag, size = 0x4, scoped, tag = 'scoped memory for tpu_custom_call.1']
    #allocation4 [shape = 's32[1]{0}', space=sflag, size = 0x4, scoped, tag = 'scoped memory for tpu_custom_call.1']
    #allocation5 [shape = 'u8[512]{0}', space=vmem, size = 0x400, scoped, tag = 'input window, operand 1, single buffered']
    #allocation6 [shape = 's32[1]{0}', space=sflag, size = 0x4, scoped, tag = 'scoped memory for tpu_custom_call.1']
    #allocation7 [shape = 'u8[4096]{0}', space=vmem, size = 0x1000, scoped, tag = 'output window, operand 0, single buffered']
    %8 = vsyncpa [#allocation3], 0
    %9 = vsyncpa [#allocation6], 0
    %10 = vsyncpa [#allocation4], 0
    // Predicated region
    $region2: #{tpu_custom_call.1} parent=1 // pred_check
      _
    $region3: #{tpu_custom_call.1} parent=1 // pred_check_branch
      %12 = sbr.rel (0) target = $region5
    $region4: #{tpu_custom_call.1} parent=1 // pred_region
      %14 = vsyncadd [#allocation3], 0
      %s16 = sshll.u32 %s0, 4
      %s17 = int_to_ptr.hbm [resolvable:$true] %s16
      %s18 = sshll.u32 [#allocation2], 4
      %s19 = int_to_ptr.vmem [resolvable:$true] %s18
      %21 = dma.hbm_to_vmem [thread:$0]  %s17, 128, %s19, [#allocation3]
    $region5: #{tpu_custom_call.1} parent=1 // pred_fallthru
      _
    // Predicated region
    $region6: #{tpu_custom_call.1} parent=1 // pred_check
      _
    $region7: #{tpu_custom_call.1} parent=1 // pred_check_branch
      %23 = sbr.rel (0) target = $region9
    $region8: #{tpu_custom_call.1} parent=1 // pred_region
      %25 = vsyncadd [#allocation6], 0
      %s27 = sshll.u32 %s1, 4
      %s28 = int_to_ptr.hbm [resolvable:$true] %s27
      %s29 = sshll.u32 [#allocation5], 4
      %s30 = int_to_ptr.vmem [resolvable:$true] %s29
      %32 = dma.hbm_to_vmem [thread:$0]  %s28, 16, %s30, [#allocation6]
    $region9: #{tpu_custom_call.1} parent=1 // pred_fallthru
      _
    // Predicated region
    $region10: #{tpu_custom_call.1} parent=1 // pred_check
      _
    $region11: #{tpu_custom_call.1} parent=1 // pred_check_branch
      %34 = sbr.rel (0) target = $region13
    $region12: #{tpu_custom_call.1} parent=1 // pred_region
      _
    $region13: #{tpu_custom_call.1} parent=1 // pred_fallthru
      _
    // Predicated region
    $region14: #{tpu_custom_call.1} parent=1 // pred_check
      _
    $region15: #{tpu_custom_call.1} parent=1 // pred_check_branch
      %36 = sbr.rel (0) target = $region17
    $region16: #{tpu_custom_call.1} parent=1 // pred_region
      %38 = dma.done [#allocation3], 128
    $region17: #{tpu_custom_call.1} parent=1 // pred_fallthru
      _
    // Predicated region
    $region18: #{tpu_custom_call.1} parent=1 // pred_check
      _
    $region19: #{tpu_custom_call.1} parent=1 // pred_check_branch
      %40 = sbr.rel (0) target = $region21
    $region20: #{tpu_custom_call.1} parent=1 // pred_region
      %42 = dma.done [#allocation6], 16
    $region21: #{tpu_custom_call.1} parent=1 // pred_fallthru
      _
    %v43 = vld [vmem:[#allocation2] sm:$0xff]
    %v44 = vrot.slane %v43, 4
    %v45 = vadd.f32 %v43, %v44
    %v46 = vrot.slane %v45, 2
    %v47 = vadd.f32 %v45, %v46
    %v48 = vrot.slane %v47, 1
    %v49 = vadd.f32 %v47, %v48
    %v50 = vmul.f32 %v49, 0.125
    %v51 = vmul.f32 %v43, %v43
    %v52 = vrot.slane %v51, 4
    %v53 = vadd.f32 %v51, %v52
    %v54 = vrot.slane %v53, 2
    %v55 = vadd.f32 %v53, %v54
    %v56 = vrot.slane %v55, 1
    %v57 = vadd.f32 %v55, %v56
    %v58 = vmul.f32 %v57, 0.125
    %v59 = vmul.f32 %v50, %v50
    %v60 = vsub.f32 %v58, %v59
    %v61 = vmax.f32 %v60, 0.0
    %v62 = vadd.f32 %v61, 1e-05
    %v63 = vrsqrt.pop %v62
    %v64 = vmul.f32 %v63, %v62
    %v65 = vmul.f32 %v64, %v63
    %v66 = vmul.f32 0.5, %v65
    %v67 = vsub.f32 1.5, %v66
    %v68 = vmul.f32 %v63, %v67
    %vm69 = vweird.f32 %v62
    %vm70 = vweird.f32 %v63
    %vm71 = vmor %vm69, %vm70
    %v72 = vsel %vm71, %v63, %v68
    %v73 = vld [vmem:[#allocation5] sm:$0x1]
    %v74 = vmul.f32 %v72, %v73
    %v75 = vld [vmem:[%s2] sm:$0x1]
    %v76 = vmul.f32 %v50, %v74
    %v77 = vsub.f32 %v75, %v76
    %v78 = vperm.slane %v74, 0
    %v79 = vmul.f32 %v43, %v78
    %v81 = vperm.slane %v77, 0
    %v83 = vadd.f32 %v79, %v81
    %84 = vst [vmem:[#allocation7] sm:$0xff] %v83
    // Predicated region
    $region22: #{tpu_custom_call.1} parent=1 // pred_check
      _
    $region23: #{tpu_custom_call.1} parent=1 // pred_check_branch
      %86 = sbr.rel (0) target = $region25
    $region24: #{tpu_custom_call.1} parent=1 // pred_region
      %88 = vsyncadd [#allocation4], 0
      %s90 = sshll.u32 [#allocation7], 4
      %s91 = int_to_ptr.vmem [resolvable:$true] %s90
      %s92 = sshll.u32 %s3, 4
      %s93 = int_to_ptr.hbm [resolvable:$true] %s92
      %95 = dma.vmem_to_hbm [thread:$0]  %s91, 128, %s93, [#allocation4]
    $region25: #{tpu_custom_call.1} parent=1 // pred_fallthru
      _
    // Predicated region
    $region26: #{tpu_custom_call.1} parent=1 // pred_check
      _
    $region27: #{tpu_custom_call.1} parent=1 // pred_check_branch
      %97 = sbr.rel (0) target = $region29
    $region28: #{tpu_custom_call.1} parent=1 // pred_region
      %99 = dma.done [#allocation4], 128
    $region29: #{tpu_custom_call.1} parent=1 // pred_fallthru
      _
    %100 = vsyncpa [#allocation3], 1
    %101 = vsyncpa [#allocation6], 1
    %102 = vsyncpa [#allocation4], 1

</llo_original>
